<compile_context>
chip_gen: v7x
topology: tpu7x:2x2x1
jax: 0.10.0
libtpu: 0.0.40
codegen_flags: <defaults>
</compile_context>

<pallas_src>
import jax
import jax.numpy as jnp
import numpy as np
from jax.experimental import pallas as pl
from jax.experimental.pallas import tpu as pltpu

NUM_CLASSES = 5
C_PAD = 128  # lane-dense padded class dimension


def _round_up(a, m):
    return (a + m - 1) // m * m


def _pick_tile_n(n):
    # Row tile: multiple of 8 (sublane granularity). 256 keeps double-buffered
    # x/out tiles at a few hundred KiB -> safe under v7x's 32 MiB scoped VMEM.
    return min(256, _round_up(n, 8))


# ---------------------------------------------------------------------------
# Inference kernel: y_pred = sigmoid(x @ W^T + b), lane-dense (TILE_N, 128) store
# ---------------------------------------------------------------------------
def _linear_sigmoid_kernel(x_ref, w_ref, b_ref, o_ref):
    # x: (TILE_N, D), w: (C_PAD, D) resident; contract on D (no transpose op needed).
    z = jax.lax.dot_general(
        x_ref[...], w_ref[...],
        dimension_numbers=(((1,), (1,)), ((), ())),
        preferred_element_type=jnp.float32)
    o_ref[...] = jax.nn.sigmoid(z + b_ref[...]).astype(o_ref.dtype)


def linear_sigmoid(x, w_pad, b_pad):
    n, d = x.shape
    tile_n = _pick_tile_n(n)
    n_pad = _round_up(n, tile_n)
    if n_pad != n:
        x = jnp.pad(x, ((0, n_pad - n), (0, 0)))
    grid = (n_pad // tile_n,)

    out = pl.pallas_call(
        _linear_sigmoid_kernel,
        out_shape=jax.ShapeDtypeStruct((n_pad, C_PAD), jnp.float32),
        grid_spec=pltpu.PrefetchScalarGridSpec(
            num_scalar_prefetch=0,
            grid=grid,
            in_specs=[
                pl.BlockSpec((tile_n, d), lambda i: (i, 0)),     # x row tile
                pl.BlockSpec((C_PAD, d), lambda i: (0, 0)),      # weight, resident
                pl.BlockSpec((1, C_PAD), lambda i: (0, 0)),      # bias, resident
            ],
            out_specs=pl.BlockSpec((tile_n, C_PAD), lambda i: (i, 0)),
        ),
        compiler_params=pltpu.CompilerParams(
            dimension_semantics=("parallel",)),                  # shard rows across TCs (v7x)
    )(x, w_pad, b_pad)
    return out[:n, :NUM_CLASSES]


# ---------------------------------------------------------------------------
# Fused training kernel: loss = mean CE( sigmoid(x @ W^T + b), y )
# Activations never leave vregs/VMEM; only a (1,1) SMEM scalar is written.
# ---------------------------------------------------------------------------
def _make_fused_loss_kernel(n_valid, num_classes):
    def kernel(x_ref, w_ref, b_ref, y_ref, loss_ref, acc_ref):
        i = pl.program_id(0)
        tile_n = x_ref.shape[0]

        @pl.when(i == 0)
        def _init():
            acc_ref[0] = jnp.float32(0.0)

        z = jax.lax.dot_general(
            x_ref[...], w_ref[...],
            dimension_numbers=(((1,), (1,)), ((), ())),
            preferred_element_type=jnp.float32)
        p = jax.nn.sigmoid(z + b_ref[...])                      # (tile_n, C_PAD)

        # Mask padded class lanes out of the softmax (finite large-negative avoids inf-inf).
        col = jax.lax.broadcasted_iota(jnp.int32, p.shape, 1)
        logits = jnp.where(col < num_classes, p, jnp.float32(-1e30))

        m = jnp.max(logits, axis=-1, keepdims=True)
        shifted = logits - m
        lse = jnp.log(jnp.sum(jnp.exp(shifted), axis=-1, keepdims=True))
        logp = shifted - lse                                    # log_softmax

        # One-hot from integer labels (VMEM (tile_n,1) block); mask padded batch rows.
        onehot = (col == y_ref[...]).astype(jnp.float32)
        row = jax.lax.broadcasted_iota(jnp.int32, p.shape, 0) + i * tile_n
        valid = (row < n_valid).astype(jnp.float32)
        acc_ref[0] = acc_ref[0] - jnp.sum(onehot * valid * logp)

        @pl.when(i == pl.num_programs(0) - 1)
        def _finalize():
            loss_ref[0, 0] = acc_ref[0] / jnp.float32(n_valid)

    return kernel


def cross_entropy_loss(x, w_pad, b_pad, y):
    n, d = x.shape
    tile_n = _pick_tile_n(n)
    n_pad = _round_up(n, tile_n)
    if n_pad != n:
        x = jnp.pad(x, ((0, n_pad - n), (0, 0)))
        y = jnp.pad(y, ((0, n_pad - n),))
    labels = y.astype(jnp.int32).reshape(-1, 1)
    grid = (n_pad // tile_n,)

    loss = pl.pallas_call(
        _make_fused_loss_kernel(n, NUM_CLASSES),
        out_shape=jax.ShapeDtypeStruct((1, 1), jnp.float32),
        grid_spec=pltpu.PrefetchScalarGridSpec(
            num_scalar_prefetch=0,
            grid=grid,
            in_specs=[
                pl.BlockSpec((tile_n, d), lambda i: (i, 0)),     # x row tile
                pl.BlockSpec((C_PAD, d), lambda i: (0, 0)),      # weight, resident
                pl.BlockSpec((1, C_PAD), lambda i: (0, 0)),      # bias, resident
                pl.BlockSpec((tile_n, 1), lambda i: (i, 0)),     # int labels per row tile
            ],
            out_specs=pl.BlockSpec(memory_space=pltpu.SMEM),     # scalar loss lives in SMEM
            scratch_shapes=[pltpu.SMEM((1,), jnp.float32)],      # running NLL sum
        ),
        compiler_params=pltpu.CompilerParams(
            dimension_semantics=("arbitrary",)),                 # sequential reduction axis
    )(x, w_pad, b_pad, labels)
    return loss[0, 0]


# ---------------------------------------------------------------------------
# TorchModel equivalent
# ---------------------------------------------------------------------------
def init_params(key, input_size, num_classes=NUM_CLASSES):
    """Mimics nn.Linear's U(-1/sqrt(in), 1/sqrt(in)) init."""
    kw, kb = jax.random.split(key)
    bound = 1.0 / float(np.sqrt(input_size))
    w = jax.random.uniform(kw, (num_classes, input_size), jnp.float32, -bound, bound)
    b = jax.random.uniform(kb, (num_classes,), jnp.float32, -bound, bound)
    return w, b


def prepare_params(w, b):
    """Pad (C, D)/(C,) params to lane-dense (C_PAD, D)/(1, C_PAD) ONCE, outside the hot path."""
    c, d = w.shape
    w_pad = jnp.zeros((C_PAD, d), jnp.float32).at[:c, :].set(w.astype(jnp.float32))
    b_pad = jnp.zeros((1, C_PAD), jnp.float32).at[0, :c].set(b.astype(jnp.float32))
    return w_pad, b_pad


def torch_model_forward(x, params, y=None):
    """x: (N, input_size) f32; params: prepare_params(w, b); y: (N,) int or None."""
    w_pad, b_pad = params
    if y is None:
        return linear_sigmoid(x, w_pad, b_pad)
    return cross_entropy_loss(x, w_pad, b_pad, y)


# Pure-JAX reference for correctness checking.
def _reference(x, w, b, y=None):
    p = jax.nn.sigmoid(x @ w.T + b)
    if y is None:
        return p
    logp = jax.nn.log_softmax(p, axis=-1)
    picked = jnp.take_along_axis(logp, y.astype(jnp.int32)[:, None], axis=-1)
    return -jnp.mean(picked)


if __name__ == "__main__":
    key = jax.random.PRNGKey(0)
    k_param, k_x, k_y = jax.random.split(key, 3)

    batch = 8
    input_size = 32

    w, b = init_params(k_param, input_size)
    params = prepare_params(w, b)
    x = jax.random.normal(k_x, (batch, input_size), jnp.float32)
    y = jax.random.randint(k_y, (batch,), 0, NUM_CLASSES, jnp.int32)

    # Inference path: sigmoid(linear(x))
    y_pred = jax.block_until_ready(torch_model_forward(x, params))
    assert y_pred.shape == (batch, NUM_CLASSES)

    # Training path: scalar cross-entropy loss (sigmoid outputs fed to CE, like the module)
    loss = jax.block_until_ready(torch_model_forward(x, params, y))
    assert loss.shape == ()

    np.testing.assert_allclose(np.asarray(y_pred), np.asarray(_reference(x, w, b)),
                               rtol=1e-5, atol=1e-5)
    np.testing.assert_allclose(float(loss), float(_reference(x, w, b, y)),
                               rtol=1e-5, atol=1e-5)

    print("KERNEL_OK")
</pallas_src>

<mosaic_0001>
module attributes {stable_mosaic.version = 11 : i64} {
  func.func @_linear_sigmoid_kernel(%arg0: i32, %arg1: memref<8x32xf32, #tpu.memory_space<vmem>>, %arg2: memref<128x32xf32, #tpu.memory_space<vmem>>, %arg3: memref<1x128xf32, #tpu.memory_space<vmem>>, %arg4: memref<8x128xf32, #tpu.memory_space<vmem>>) attributes {dimension_semantics = [#tpu.dimension_semantics<parallel>], iteration_bounds = array<i64: 1>, scalar_prefetch = 0 : i64, scratch_operands = 0 : i64, tpu.core_type = #tpu.core_type<tc>, window_params = [{transform_indices = @transform_0, window_bounds = array<i64: 8, 32>}, {pipeline_mode = #tpu.pipeline_mode<synchronous>, transform_indices = @transform_1, window_bounds = array<i64: 128, 32>}, {pipeline_mode = #tpu.pipeline_mode<synchronous>, transform_indices = @transform_2, window_bounds = array<i64: 1, 128>}, {transform_indices = @transform_3, window_bounds = array<i64: 8, 128>}]} {
    %c0 = arith.constant 0 : index
    %c0_0 = arith.constant 0 : index
    %0 = vector.load %arg1[%c0, %c0_0] : memref<8x32xf32, #tpu.memory_space<vmem>>, vector<8x32xf32>
    %c0_1 = arith.constant 0 : index
    %c0_2 = arith.constant 0 : index
    %1 = vector.load %arg2[%c0_1, %c0_2] : memref<128x32xf32, #tpu.memory_space<vmem>>, vector<128x32xf32>
    %cst = arith.constant dense<0.000000e+00> : vector<8x128xf32>
    %2 = tpu.matmul %0, %1, %cst {dimension_numbers = #tpu.dot_dimension_numbers<[1], [1], [0], [0], [0, 0, 1, 0], [], []>} : vector<8x32xf32>, vector<128x32xf32>, vector<8x128xf32> -> vector<8x128xf32>
    %c0_3 = arith.constant 0 : index
    %c0_4 = arith.constant 0 : index
    %3 = vector.load %arg3[%c0_3, %c0_4] : memref<1x128xf32, #tpu.memory_space<vmem>>, vector<1x128xf32>
    %4 = vector.broadcast %3 : vector<1x128xf32> to vector<8x128xf32>
    %5 = arith.addf %2, %4 : vector<8x128xf32>
    %6 = arith.negf %5 : vector<8x128xf32>
    %7 = math.exp %6 : vector<8x128xf32>
    %cst_5 = arith.constant 1.000000e+00 : f32
    %8 = vector.broadcast %cst_5 : f32 to vector<8x128xf32>
    %9 = arith.addf %8, %7 : vector<8x128xf32>
    %10 = arith.divf %8, %9 : vector<8x128xf32>
    %c0_6 = arith.constant 0 : index
    %c0_7 = arith.constant 0 : index
    %11 = vector.load %arg4[%c0_6, %c0_7] : memref<8x128xf32, #tpu.memory_space<vmem>>, vector<8x128xf32>
    tpu.vector_store %arg4[%c0_6, %c0_7], %10 {strides = array<i32>} : memref<8x128xf32, #tpu.memory_space<vmem>>, vector<8x128xf32>,
    return
  }
  func.func @transform_0(%arg0: i32) -> (i32, i32) {
    %c0_i32 = arith.constant 0 : i32
    %c0_i32_0 = arith.constant 0 : i32
    return %arg0, %c0_i32 : i32, i32
  }
  func.func @transform_1(%arg0: i32) -> (i32, i32) {
    %c0_i32 = arith.constant 0 : i32
    %c0_i32_0 = arith.constant 0 : i32
    %c0_i32_1 = arith.constant 0 : i32
    return %c0_i32, %c0_i32_0 : i32, i32
  }
  func.func @transform_2(%arg0: i32) -> (i32, i32) {
    %c0_i32 = arith.constant 0 : i32
    %c0_i32_0 = arith.constant 0 : i32
    %c0_i32_1 = arith.constant 0 : i32
    return %c0_i32, %c0_i32_0 : i32, i32
  }
  func.func @transform_3(%arg0: i32) -> (i32, i32) {
    %c0_i32 = arith.constant 0 : i32
    %c0_i32_0 = arith.constant 0 : i32
    return %arg0, %c0_i32 : i32, i32
  }
}

</mosaic_0001>

<llo_original>
// kernel: tpu_custom_call.1
$region0: #{tpu_custom_call.1}
  #allocation0 [shape = 'u32[]', space=smem, size = 0x4, offset = 0x4, fixed_abs, tag = 'smem constant byte address 0x4 - core index']
  #allocation1 [shape = 'u32[144,128]{1,0:T(1,128)}', space=vmem, size = 0x12000, scoped, tag = 'internal scratch']
  %s0 = inlined_call_operand.vmem [shape: f32[8,32], index: 0, kind: input, shape index: {}]
  %s1 = inlined_call_operand.vmem [shape: f32[128,32], index: 1, kind: input, shape index: {}]
  %s2 = inlined_call_operand.vmem [shape: f32[1,128], index: 2, kind: input, shape index: {}]
  %s3 = inlined_call_operand.hbm [shape: f32[8,128], index: 3, kind: output, shape index: {}]
  %s4 = sld [smem:[#allocation0]]
  $region22: #{tpu_custom_call.1} parent=0
    _
  %s6 = ssub.s32 1, %s4
  %s7 = scalar_select 0, %s6, %s4
  $region1: #{tpu_custom_call.1} parent=0
    #allocation2 [shape = 'u8[4096]{0}', space=vmem, size = 0x1000, scoped, tag = 'output window, operand 0, single buffered']
    #allocation3 [shape = 's32[1]{0}', space=sflag, size = 0x4, scoped, tag = 'scoped memory for tpu_custom_call.1']
    %8 = vsyncpa [#allocation3], 0
    // Predicated region
    $region2: #{tpu_custom_call.1} parent=1 // pred_check
      _
    $region3: #{tpu_custom_call.1} parent=1 // pred_check_branch
      %10 = sbr.rel (0) target = $region5
    $region4: #{tpu_custom_call.1} parent=1 // pred_region
      _
    $region5: #{tpu_custom_call.1} parent=1 // pred_fallthru
      _
    // Predicated region
    $region6: #{tpu_custom_call.1} parent=1 // pred_check
      _
    $region7: #{tpu_custom_call.1} parent=1 // pred_check_branch
      %12 = sbr.rel (0) target = $region9
    $region8: #{tpu_custom_call.1} parent=1 // pred_region
      _
    $region9: #{tpu_custom_call.1} parent=1 // pred_fallthru
      _
    // Predicated region
    $region10: #{tpu_custom_call.1} parent=1 // pred_check
      _
    $region11: #{tpu_custom_call.1} parent=1 // pred_check_branch
      %14 = sbr.rel (0) target = $region13
    $region12: #{tpu_custom_call.1} parent=1 // pred_region
      _
    $region13: #{tpu_custom_call.1} parent=1 // pred_fallthru
      _
    %v15 = vld [vmem:[%s0] sm:$0xff]
    %v16 = vld [vmem:[%s1] sm:$0xff]
    %v17 = vld [vmem:[%s1 + $0x8] sm:$0xff]
    %v18 = vld [vmem:[%s1 + $0x10] sm:$0xff]
    %v19 = vld [vmem:[%s1 + $0x18] sm:$0xff]
    %v20 = vld [vmem:[%s1 + $0x20] sm:$0xff]
    %v21 = vld [vmem:[%s1 + $0x28] sm:$0xff]
    %v22 = vld [vmem:[%s1 + $0x30] sm:$0xff]
    %v23 = vld [vmem:[%s1 + $0x38] sm:$0xff]
    %v24 = vld [vmem:[%s1 + $0x40] sm:$0xff]
    %v25 = vld [vmem:[%s1 + $0x48] sm:$0xff]
    %v26 = vld [vmem:[%s1 + $0x50] sm:$0xff]
    %v27 = vld [vmem:[%s1 + $0x58] sm:$0xff]
    %v28 = vld [vmem:[%s1 + $0x60] sm:$0xff]
    %v29 = vld [vmem:[%s1 + $0x68] sm:$0xff]
    %v30 = vld [vmem:[%s1 + $0x70] sm:$0xff]
    %v31 = vld [vmem:[%s1 + $0x78] sm:$0xff]
    %v32 = vld [vmem:[%s2] sm:$0x1]
    %v34 = vlaneseq
    %v35 = vshrl.u32 %v34, 7
    %v36 = vsub.s32 0, %v35
    %v37 = vrot.slane %v32, %v36
    %vm39 = vcmask 261120
    %v41 = vsel %vm39, %v15, 0
    %v44 = vsel %vm39, %v16, 0
    %v47 = vsel %vm39, %v17, 0
    %v50 = vsel %vm39, %v18, 0
    %v53 = vsel %vm39, %v19, 0
    %v56 = vsel %vm39, %v20, 0
    %v59 = vsel %vm39, %v21, 0
    %v62 = vsel %vm39, %v22, 0
    %v65 = vsel %vm39, %v23, 0
    %v68 = vsel %vm39, %v24, 0
    %v71 = vsel %vm39, %v25, 0
    %v74 = vsel %vm39, %v26, 0
    %v77 = vsel %vm39, %v27, 0
    %v80 = vsel %vm39, %v28, 0
    %v83 = vsel %vm39, %v29, 0
    %v86 = vsel %vm39, %v30, 0
    %v89 = vsel %vm39, %v31, 0
    %91 = vmatprep.subr.mxu0 0.0
    %92 = vmatpush1.xpose.msra.mxu0 %v44
    %93 = vmatprep.subr.mxu0 0.0
    %94 = vmatpush1.xpose.msra.mxu0 %v47
    %95 = vmatprep.subr.mxu0 0.0
    %96 = vmatpush1.xpose.msra.mxu0 %v50
    %97 = vmatprep.subr.mxu0 0.0
    %98 = vmatpush1.xpose.msra.mxu0 %v53
    %99 = vmatprep.subr.mxu0 0.0
    %100 = vmatpush1.xpose.msra.mxu0 %v56
    %101 = vmatprep.subr.mxu0 0.0
    %102 = vmatpush1.xpose.msra.mxu0 %v59
    %103 = vmatprep.subr.mxu0 0.0
    %104 = vmatpush1.xpose.msra.mxu0 %v62
    %105 = vmatprep.subr.mxu0 0.0
    %106 = vmatpush1.xpose.msra.mxu0 %v65
    %107 = vmatprep.subr.mxu0 0.0
    %108 = vmatpush1.xpose.msra.mxu0 %v68
    %109 = vmatprep.subr.mxu0 0.0
    %110 = vmatpush1.xpose.msra.mxu0 %v71
    %111 = vmatprep.subr.mxu0 0.0
    %112 = vmatpush1.xpose.msra.mxu0 %v74
    %113 = vmatprep.subr.mxu0 0.0
    %114 = vmatpush1.xpose.msra.mxu0 %v77
    %115 = vmatprep.subr.mxu0 0.0
    %116 = vmatpush1.xpose.msra.mxu0 %v80
    %117 = vmatprep.subr.mxu0 0.0
    %118 = vmatpush1.xpose.msra.mxu0 %v83
    %119 = vmatprep.subr.mxu0 0.0
    %120 = vmatpush1.xpose.msra.mxu0 %v86
    %121 = vmatprep.subr.mxu0 0.0
    %122 = vmatpush1.xpose.msra.mxu0 %v89
    %123 = vmatprep.subr.mxu0 0.0
    %124 = vmatpush1.xpose.msra.mxu0 0.0
    %125 = vmatprep.subr.mxu0 0.0
    %126 = vmatpush1.xpose.msra.mxu0 0.0
    %127 = vmatprep.subr.mxu0 0.0
    %128 = vmatpush1.xpose.msra.mxu0 0.0
    %129 = vmatprep.subr.mxu0 0.0
    %130 = vmatpush1.xpose.msra.mxu0 0.0
    %131 = vmatprep.subr.mxu0 0.0
    %132 = vmatpush1.xpose.msra.mxu0 0.0
    %133 = vmatprep.subr.mxu0 0.0
    %134 = vmatpush1.xpose.msra.mxu0 0.0
    %135 = vmatprep.subr.mxu0 0.0
    %136 = vmatpush1.xpose.msra.mxu0 0.0
    %137 = vmatprep.subr.mxu0 0.0
    %138 = vmatpush1.xpose.msra.mxu0 0.0
    %139 = vmatprep.subr.mxu0 0.0
    %140 = vmatpush1.xpose.msra.mxu0 0.0
    %141 = vmatprep.subr.mxu0 0.0
    %142 = vmatpush1.xpose.msra.mxu0 0.0
    %143 = vmatprep.subr.mxu0 0.0
    %144 = vmatpush1.xpose.msra.mxu0 0.0
    %145 = vmatprep.subr.mxu0 0.0
    %146 = vmatpush1.xpose.msra.mxu0 0.0
    %147 = vmatprep.subr.mxu0 0.0
    %148 = vmatpush1.xpose.msra.mxu0 0.0
    %149 = vmatprep.subr.mxu0 0.0
    %150 = vmatpush1.xpose.msra.mxu0 0.0
    %151 = vmatprep.subr.mxu0 0.0
    %152 = vmatpush1.xpose.msra.mxu0 0.0
    %153 = vmatprep.subr.mxu0 0.0
    %154 = vmatpush1.xpose.msra.mxu0 0.0
    %155 = vmatprep.mubr.f32.mxu0 0.0
    %156 = vmatmul.mubr.f32.gmra.mrb[0].mxu0 %v41
    %v157 = vpop.f32.mrb[0].mxu0
    %v158 = vadd.f32 %v37, %v157
    %v159 = vpop.f32.mrb[0].mxu0
    %160 = vdwg.mxu0
    %v161 = vxor.u32 %v158, 2147483648
    %v162 = vmul.f32 %v161, 1.442695
    %v163 = vpow.pop %v162
    %v164 = vadd.f32 %v163, 1.0
    %v165 = vrcp.pop %v164
    %v166 = vmul.f32 1.0, %v165
    %167 = vst [vmem:[#allocation2] sm:$0xff] %v166
    // Predicated region
    $region14: #{tpu_custom_call.1} parent=1 // pred_check
      _
    $region15: #{tpu_custom_call.1} parent=1 // pred_check_branch
      %169 = sbr.rel (0) target = $region17
    $region16: #{tpu_custom_call.1} parent=1 // pred_region
      %s171 = ssub.s32 128, 128
      %172 = vsyncadd [#allocation3], %s171
      %s174 = sshll.u32 [#allocation2], 4
      %s175 = int_to_ptr.vmem [resolvable:$true] %s174
      %177 = dma.vmem_to_hbm [thread:$0]  %s175, 128, %s3, [#allocation3]
    $region17: #{tpu_custom_call.1} parent=1 // pred_fallthru
      _
    // Predicated region
    $region18: #{tpu_custom_call.1} parent=1 // pred_check
      _
    $region19: #{tpu_custom_call.1} parent=1 // pred_check_branch
      %179 = sbr.rel (0) target = $region21
    $region20: #{tpu_custom_call.1} parent=1 // pred_region
      %180 = dma.done [#allocation3], 128
    $region21: #{tpu_custom_call.1} parent=1 // pred_fallthru
      _
    %181 = vsyncpa [#allocation3], 1

</llo_original>
